<compile_context>
chip_gen: v5e
topology: v5e:2x2
jax: 0.10.0
libtpu: 0.0.40
codegen_flags: <defaults>
</compile_context>

<pallas_src>
import functools
import math

import jax
import jax.numpy as jnp
from jax.experimental import pallas as pl
from jax.experimental.pallas import tpu as pltpu

ALPHA = 0.5
CE_RATIO = 0.5
SMOOTH = 1.0
EPS = 1e-9
LOG_EPS = math.log(EPS)          # clip(p, EPS, .)  in log space
LOG_1M_EPS = math.log1p(-EPS)    # clip(p, ., 1-EPS) in log space

LANES = 128
MAX_TR = 4096                    # rows per block: 4096*128*4B = 2 MiB f32/input
NCORES = 2                       # leading "parallel" axis: both TCs on v7x,
                                 # effectively free on single-TC v5e/v6e


def _elem_terms(x, t):
    """Per-element (p*t, p+t, raw BCE) with one exp, one divide, one log.

    Identities (numerically robust for all x):
        log(sigmoid(x))     = min(x, 0)  - log(1 + exp(-|x|))
        log(1 - sigmoid(x)) = -max(x, 0) - log(1 + exp(-|x|))
    The PyTorch clip(p, EPS, 1-EPS) is reproduced as clamps in log space.
    The -ALPHA factor is hoisted out of the per-element BCE (applied in glue).
    """
    em = jnp.exp(-jnp.abs(x))                      # in (0, 1]
    lse = jnp.log(1.0 + em)                        # shared log term
    r = 1.0 / (1.0 + em)
    p = jnp.where(x >= 0.0, r, 1.0 - r)            # sigmoid(x)
    log_p = jnp.clip(jnp.minimum(x, 0.0) - lse, LOG_EPS, LOG_1M_EPS)
    log_1mp = jnp.clip(-jnp.maximum(x, 0.0) - lse, LOG_EPS, LOG_1M_EPS)
    bce_raw = t * log_p + (1.0 - ALPHA) * (1.0 - t) * log_1mp
    return p * t, p + t, bce_raw


def _combo_reduce_kernel(x_ref, t_ref, acc_ref, *, tr):
    """Accumulates per-core (24,128) partials of [p*t, p+t, bce_raw]."""
    i = pl.program_id(1)

    @pl.when(i == 0)
    def _():
        acc_ref[...] = jnp.zeros_like(acc_ref)

    x = x_ref[...].astype(jnp.float32)
    t = t_ref[...].astype(jnp.float32)
    pt, ps, bce = _elem_terms(x, t)

    def fold(v):
        # (tr,128) -> (8,128): tile-preserving reshape + pure VPU tree-add;
        # the single cross-sublane/lane reduce happens once in the JAX glue.
        return jnp.sum(v.reshape(tr // 8, 8, LANES), axis=0)

    acc_ref[0:8, :] += fold(pt)
    acc_ref[8:16, :] += fold(ps)
    acc_ref[16:24, :] += fold(bce)


@jax.jit
def combo_loss(inputs, targets):
    """Pallas implementation of ComboLoss.forward(inputs, targets)."""
    x_flat = inputs.reshape(-1)
    t_flat = targets.reshape(-1)
    n = x_flat.shape[0]

    rows_total = n // LANES
    tr = (min(rows_total, MAX_TR) // 8) * 8        # sublane-aligned block rows

    s_int = jnp.float32(0.0)
    s_pt = jnp.float32(0.0)
    s_bce = jnp.float32(0.0)

    main_elems = 0
    if tr > 0:
        num_blocks = rows_total // tr
        ncores = NCORES if num_blocks >= NCORES else 1
        bpc = num_blocks // ncores                 # full blocks per core
        main_rows = ncores * bpc * tr
        main_elems = main_rows * LANES

        x2 = x_flat[:main_elems].reshape(main_rows, LANES)
        t2 = t_flat[:main_elems].reshape(main_rows, LANES)

        kern = functools.partial(_combo_reduce_kernel, tr=tr)
        in_blk = pl.BlockSpec((tr, LANES), lambda c, i: (c * bpc + i, 0))
        acc_blk = pl.BlockSpec((None, 24, LANES), lambda c, i: (c, 0, 0))

        parts = pl.pallas_call(
            kern,
            out_shape=jax.ShapeDtypeStruct((ncores, 24, LANES), jnp.float32),
            grid_spec=pltpu.PrefetchScalarGridSpec(
                num_scalar_prefetch=0,
                grid=(ncores, bpc),
                in_specs=[in_blk, in_blk],
                out_specs=acc_blk,
            ),
            compiler_params=pltpu.CompilerParams(
                dimension_semantics=("parallel", "arbitrary"),
                vmem_limit_bytes=32 * 1024 * 1024),
        )(x2, t2)

        s_int += jnp.sum(parts[:, 0:8, :])
        s_pt += jnp.sum(parts[:, 8:16, :])
        s_bce += jnp.sum(parts[:, 16:24, :])

    if main_elems < n:
        # Ragged remainder (< tr*128 + 127 elements): fused plain-XLA tail.
        xr = x_flat[main_elems:].astype(jnp.float32)
        tm = t_flat[main_elems:].astype(jnp.float32)
        pt, ps, bce = _elem_terms(xr, tm)
        s_int += jnp.sum(pt)
        s_pt += jnp.sum(ps)
        s_bce += jnp.sum(bce)

    dice = (2.0 * s_int + SMOOTH) / (s_pt + SMOOTH)
    weighted_ce = (-ALPHA) * s_bce / jnp.float32(n)
    return CE_RATIO * weighted_ce - (1.0 - CE_RATIO) * dice


def _combo_loss_ref(inputs, targets):
    """Pure-JAX reference mirroring the PyTorch forward exactly."""
    p = jax.nn.sigmoid(inputs.reshape(-1).astype(jnp.float32))
    t = targets.reshape(-1).astype(jnp.float32)
    intersection = jnp.sum(p * t)
    dice = (2.0 * intersection + SMOOTH) / (jnp.sum(p) + jnp.sum(t) + SMOOTH)
    pc = jnp.clip(p, EPS, 1.0 - EPS)
    out = -(ALPHA * (t * jnp.log(pc)
                     + (1.0 - ALPHA) * (1.0 - t) * jnp.log(1.0 - pc)))
    weighted_ce = jnp.mean(out)
    return CE_RATIO * weighted_ce - (1.0 - CE_RATIO) * dice


if __name__ == "__main__":
    key = jax.random.PRNGKey(0)
    k1, k2 = jax.random.split(key)

    # NCHW logits and binary targets (e.g. segmentation maps).
    x = jax.random.normal(k1, (2, 4, 16, 16), dtype=jnp.float32)
    tgt = (jax.random.uniform(k2, (2, 4, 16, 16)) > 0.5).astype(jnp.float32)

    loss = combo_loss(x, tgt)
    jax.block_until_ready(loss)

    ref = _combo_loss_ref(x, tgt)
    assert jnp.allclose(loss, ref, atol=1e-5, rtol=1e-5), (loss, ref)

    print("KERNEL_OK")
</pallas_src>

<mosaic_0001>
module attributes {stable_mosaic.version = 11 : i64} {
  func.func @_combo_reduce_kernel(%arg0: i32, %arg1: i32, %arg2: memref<16x128xf32, #tpu.memory_space<vmem>>, %arg3: memref<16x128xf32, #tpu.memory_space<vmem>>, %arg4: memref<1x24x128xf32, #tpu.memory_space<vmem>>) attributes {dimension_semantics = [#tpu.dimension_semantics<parallel>, #tpu.dimension_semantics<arbitrary>], iteration_bounds = array<i64: 1, 1>, scalar_prefetch = 0 : i64, scratch_operands = 0 : i64, tpu.core_type = #tpu.core_type<tc>, window_params = [{transform_indices = @transform_0, window_bounds = array<i64: 16, 128>}, {transform_indices = @transform_1, window_bounds = array<i64: 16, 128>}, {transform_indices = @transform_2, window_bounds = array<i64: 1, 24, 128>}]} {
    %c0_i32 = arith.constant 0 : i32
    %0 = arith.cmpi eq, %arg1, %c0_i32 : i32
    %1 = arith.extui %0 : i1 to i32
    %c0_i32_0 = arith.constant 0 : i32
    %2 = arith.cmpi ne, %1, %c0_i32_0 : i32
    scf.if %2 {
      %cst_37 = arith.constant 0.000000e+00 : f32
      %70 = vector.broadcast %cst_37 : f32 to vector<24x128xf32>
      %c0_38 = arith.constant 0 : index
      %c0_39 = arith.constant 0 : index
      %c0_40 = arith.constant 0 : index
      %71 = vector.load %arg4[%c0_38, %c0_39, %c0_40] : memref<1x24x128xf32, #tpu.memory_space<vmem>>, vector<1x24x128xf32>
      %72 = vector.shape_cast %71 : vector<1x24x128xf32> to vector<24x128xf32>
      %73 = vector.shape_cast %70 : vector<24x128xf32> to vector<1x24x128xf32>
      tpu.vector_store %arg4[%c0_38, %c0_39, %c0_40], %73 {strides = array<i32>} : memref<1x24x128xf32, #tpu.memory_space<vmem>>, vector<1x24x128xf32>,
    } else {
    }
    %c0 = arith.constant 0 : index
    %c0_1 = arith.constant 0 : index
    %3 = vector.load %arg2[%c0, %c0_1] : memref<16x128xf32, #tpu.memory_space<vmem>>, vector<16x128xf32>
    %c0_2 = arith.constant 0 : index
    %c0_3 = arith.constant 0 : index
    %4 = vector.load %arg3[%c0_2, %c0_3] : memref<16x128xf32, #tpu.memory_space<vmem>>, vector<16x128xf32>
    %5 = math.absf %3 : vector<16x128xf32>
    %cst = arith.constant 0.000000e+00 : f32
    %6 = vector.broadcast %cst : f32 to vector<16x128xf32>
    %7 = arith.subf %6, %5 : vector<16x128xf32>
    %8 = math.exp %7 : vector<16x128xf32>
    %cst_4 = arith.constant 1.000000e+00 : f32
    %9 = vector.broadcast %cst_4 : f32 to vector<16x128xf32>
    %10 = arith.addf %9, %8 : vector<16x128xf32>
    %11 = math.log %10 : vector<16x128xf32>
    %cst_5 = arith.constant 1.000000e+00 : f32
    %12 = vector.broadcast %cst_5 : f32 to vector<16x128xf32>
    %13 = arith.addf %12, %8 : vector<16x128xf32>
    %cst_6 = arith.constant 1.000000e+00 : f32
    %14 = vector.broadcast %cst_6 : f32 to vector<16x128xf32>
    %15 = arith.divf %14, %13 : vector<16x128xf32>
    %cst_7 = arith.constant 0.000000e+00 : f32
    %16 = vector.broadcast %cst_7 : f32 to vector<16x128xf32>
    %17 = arith.cmpf oge, %3, %16 : vector<16x128xf32>
    %cst_8 = arith.constant 1.000000e+00 : f32
    %18 = vector.broadcast %cst_8 : f32 to vector<16x128xf32>
    %19 = arith.subf %18, %15 : vector<16x128xf32>
    %20 = arith.select %17, %15, %19 : vector<16x128xi1>, vector<16x128xf32>
    %cst_9 = arith.constant 0.000000e+00 : f32
    %21 = vector.broadcast %cst_9 : f32 to vector<16x128xf32>
    %22 = arith.minimumf %3, %21 : vector<16x128xf32>
    %23 = arith.subf %22, %11 : vector<16x128xf32>
    %cst_10 = arith.constant -20.7232666 : f32
    %cst_11 = arith.constant -9.99999971E-10 : f32
    %24 = vector.broadcast %cst_10 : f32 to vector<16x128xf32>
    %25 = arith.maximumf %24, %23 : vector<16x128xf32>
    %26 = vector.broadcast %cst_11 : f32 to vector<16x128xf32>
    %27 = arith.minimumf %26, %25 : vector<16x128xf32>
    %cst_12 = arith.constant 0.000000e+00 : f32
    %28 = vector.broadcast %cst_12 : f32 to vector<16x128xf32>
    %29 = arith.maximumf %3, %28 : vector<16x128xf32>
    %cst_13 = arith.constant 0.000000e+00 : f32
    %30 = vector.broadcast %cst_13 : f32 to vector<16x128xf32>
    %31 = arith.subf %30, %29 : vector<16x128xf32>
    %32 = arith.subf %31, %11 : vector<16x128xf32>
    %cst_14 = arith.constant -20.7232666 : f32
    %cst_15 = arith.constant -9.99999971E-10 : f32
    %33 = vector.broadcast %cst_14 : f32 to vector<16x128xf32>
    %34 = arith.maximumf %33, %32 : vector<16x128xf32>
    %35 = vector.broadcast %cst_15 : f32 to vector<16x128xf32>
    %36 = arith.minimumf %35, %34 : vector<16x128xf32>
    %37 = arith.mulf %4, %27 : vector<16x128xf32>
    %cst_16 = arith.constant 1.000000e+00 : f32
    %38 = vector.broadcast %cst_16 : f32 to vector<16x128xf32>
    %39 = arith.subf %38, %4 : vector<16x128xf32>
    %cst_17 = arith.constant 5.000000e-01 : f32
    %40 = vector.broadcast %cst_17 : f32 to vector<16x128xf32>
    %41 = arith.mulf %40, %39 : vector<16x128xf32>
    %42 = arith.mulf %41, %36 : vector<16x128xf32>
    %43 = arith.addf %37, %42 : vector<16x128xf32>
    %44 = arith.mulf %20, %4 : vector<16x128xf32>
    %45 = arith.addf %20, %4 : vector<16x128xf32>
    %c0_18 = arith.constant 0 : index
    %c0_19 = arith.constant 0 : index
    %c0_20 = arith.constant 0 : index
    %46 = vector.load %arg4[%c0_18, %c0_19, %c0_20] : memref<1x24x128xf32, #tpu.memory_space<vmem>>, vector<1x8x128xf32>
    %47 = vector.shape_cast %46 : vector<1x8x128xf32> to vector<8x128xf32>
    %48 = vector.shape_cast %44 : vector<16x128xf32> to vector<2x8x128xf32>
    %cst_21 = arith.constant dense<0.000000e+00> : vector<8x128xf32>
    %49 = vector.multi_reduction <add>, %48, %cst_21 [0] : vector<2x8x128xf32> to vector<8x128xf32>
    %50 = arith.addf %47, %49 : vector<8x128xf32>
    %c0_22 = arith.constant 0 : index
    %c0_23 = arith.constant 0 : index
    %c0_24 = arith.constant 0 : index
    %51 = vector.load %arg4[%c0_22, %c0_23, %c0_24] : memref<1x24x128xf32, #tpu.memory_space<vmem>>, vector<1x8x128xf32>
    %52 = vector.shape_cast %51 : vector<1x8x128xf32> to vector<8x128xf32>
    %53 = vector.shape_cast %50 : vector<8x128xf32> to vector<1x8x128xf32>
    tpu.vector_store %arg4[%c0_22, %c0_23, %c0_24], %53 {strides = array<i32>} : memref<1x24x128xf32, #tpu.memory_space<vmem>>, vector<1x8x128xf32>,
    %c0_25 = arith.constant 0 : index
    %c8 = arith.constant 8 : index
    %c0_26 = arith.constant 0 : index
    %54 = vector.load %arg4[%c0_25, %c8, %c0_26] : memref<1x24x128xf32, #tpu.memory_space<vmem>>, vector<1x8x128xf32>
    %55 = vector.shape_cast %54 : vector<1x8x128xf32> to vector<8x128xf32>
    %56 = vector.shape_cast %45 : vector<16x128xf32> to vector<2x8x128xf32>
    %cst_27 = arith.constant dense<0.000000e+00> : vector<8x128xf32>
    %57 = vector.multi_reduction <add>, %56, %cst_27 [0] : vector<2x8x128xf32> to vector<8x128xf32>
    %58 = arith.addf %55, %57 : vector<8x128xf32>
    %c0_28 = arith.constant 0 : index
    %c8_29 = arith.constant 8 : index
    %c0_30 = arith.constant 0 : index
    %59 = vector.load %arg4[%c0_28, %c8_29, %c0_30] : memref<1x24x128xf32, #tpu.memory_space<vmem>>, vector<1x8x128xf32>
    %60 = vector.shape_cast %59 : vector<1x8x128xf32> to vector<8x128xf32>
    %61 = vector.shape_cast %58 : vector<8x128xf32> to vector<1x8x128xf32>
    tpu.vector_store %arg4[%c0_28, %c8_29, %c0_30], %61 {strides = array<i32>} : memref<1x24x128xf32, #tpu.memory_space<vmem>>, vector<1x8x128xf32>,
    %c0_31 = arith.constant 0 : index
    %c16 = arith.constant 16 : index
    %c0_32 = arith.constant 0 : index
    %62 = vector.load %arg4[%c0_31, %c16, %c0_32] : memref<1x24x128xf32, #tpu.memory_space<vmem>>, vector<1x8x128xf32>
    %63 = vector.shape_cast %62 : vector<1x8x128xf32> to vector<8x128xf32>
    %64 = vector.shape_cast %43 : vector<16x128xf32> to vector<2x8x128xf32>
    %cst_33 = arith.constant dense<0.000000e+00> : vector<8x128xf32>
    %65 = vector.multi_reduction <add>, %64, %cst_33 [0] : vector<2x8x128xf32> to vector<8x128xf32>
    %66 = arith.addf %63, %65 : vector<8x128xf32>
    %c0_34 = arith.constant 0 : index
    %c16_35 = arith.constant 16 : index
    %c0_36 = arith.constant 0 : index
    %67 = vector.load %arg4[%c0_34, %c16_35, %c0_36] : memref<1x24x128xf32, #tpu.memory_space<vmem>>, vector<1x8x128xf32>
    %68 = vector.shape_cast %67 : vector<1x8x128xf32> to vector<8x128xf32>
    %69 = vector.shape_cast %66 : vector<8x128xf32> to vector<1x8x128xf32>
    tpu.vector_store %arg4[%c0_34, %c16_35, %c0_36], %69 {strides = array<i32>} : memref<1x24x128xf32, #tpu.memory_space<vmem>>, vector<1x8x128xf32>,
    return
  }
  func.func @transform_0(%arg0: i32, %arg1: i32) -> (i32, i32) {
    %c1_i32 = arith.constant 1 : i32
    %0 = arith.muli %arg0, %c1_i32 : i32
    %1 = arith.addi %0, %arg1 : i32
    %c0_i32 = arith.constant 0 : i32
    %c0_i32_0 = arith.constant 0 : i32
    return %1, %c0_i32 : i32, i32
  }
  func.func @transform_1(%arg0: i32, %arg1: i32) -> (i32, i32) {
    %c1_i32 = arith.constant 1 : i32
    %0 = arith.muli %arg0, %c1_i32 : i32
    %1 = arith.addi %0, %arg1 : i32
    %c0_i32 = arith.constant 0 : i32
    %c0_i32_0 = arith.constant 0 : i32
    return %1, %c0_i32 : i32, i32
  }
  func.func @transform_2(%arg0: i32, %arg1: i32) -> (i32, i32, i32) {
    %c0_i32 = arith.constant 0 : i32
    %c0_i32_0 = arith.constant 0 : i32
    %c0_i32_1 = arith.constant 0 : i32
    return %arg0, %c0_i32, %c0_i32_0 : i32, i32, i32
  }
}

</mosaic_0001>

<llo_original>
// kernel: combo_loss.1
$region0: #{combo_loss.1}
  #allocation0 [shape = 'u32[]', space=smem, size = 0x4, offset = 0x4, fixed_abs, tag = 'smem constant byte address 0x4 - core index']
  #allocation1 [shape = 'u32[72,128]{1,0:T(1,128)}', space=vmem, size = 0x9000, scoped, tag = 'internal scratch']
  %s0 = inlined_call_operand.vmem [shape: f32[16,128], index: 0, kind: input, shape index: {}]
  %s1 = inlined_call_operand.vmem [shape: f32[16,128], index: 1, kind: input, shape index: {}]
  %s2 = inlined_call_operand.vmem [shape: f32[1,24,128], index: 2, kind: output, shape index: {}]
  %s3 = sld [smem:[#allocation0]]
  $region22: #{combo_loss.1} parent=0
    _
  %s5 = ssub.s32 1, %s3
  %s6 = scalar_select 0, %s5, %s3
  // Predicated region
  $region2: #{combo_loss.1} parent=0 // pred_check
    _
  $region3: #{combo_loss.1} parent=0 // pred_check_branch
    %8 = sbr.rel (0) target = $region5
  $region4: #{combo_loss.1} parent=0 // pred_region
    %s9 = sadd.s32 0, 0
    %s10 = smul.u32 2, %s9
    %p11 = scmp.lt.s32.totalorder %s10, 1
    %s12 = scalar_select %p11, %s10, 1
    %s13 = smul.addr %s12, 8
    %s14 = scalar_lea.vmem %s0, %s13
    %s15 = sadd.s32 0, 0
    %s16 = smul.u32 2, %s15
  $region5: #{combo_loss.1} parent=0 // pred_fallthru
    _
  // Predicated region
  $region6: #{combo_loss.1} parent=0 // pred_check
    _
  $region7: #{combo_loss.1} parent=0 // pred_check_branch
    %18 = sbr.rel (0) target = $region9
  $region8: #{combo_loss.1} parent=0 // pred_region
    %s19 = sadd.s32 0, 0
    %s20 = smul.u32 2, %s19
    %p21 = scmp.lt.s32.totalorder %s20, 1
    %s22 = scalar_select %p21, %s20, 1
    %s23 = smul.addr %s22, 8
    %s24 = scalar_lea.vmem %s1, %s23
    %s25 = sadd.s32 0, 0
    %s26 = smul.u32 2, %s25
  $region9: #{combo_loss.1} parent=0 // pred_fallthru
    _
  %s27 = sadd.s32 0, 0
  %s28 = smul.u32 2, %s27
  %p29 = scmp.lt.s32.totalorder %s28, 1
  %s30 = scalar_select %p29, %s28, 1
  %s31 = smul.addr %s30, 8
  %s32 = scalar_lea.vmem %s0, %s31
  %s33 = sadd.s32 0, 0
  %s34 = smul.u32 2, %s33
  %p35 = scmp.lt.s32.totalorder %s34, 1
  %s36 = scalar_select %p35, %s34, 1
  %s37 = smul.addr %s36, 8
  %s38 = scalar_lea.vmem %s1, %s37
  %s39 = sadd.s32 0, 0
  %s40 = smul.u32 2, %s39
  %p41 = scmp.lt.s32.totalorder %s40, 1
  %s42 = scalar_select %p41, %s40, 1
  %s43 = smul.addr %s42, 8
  %s44 = scalar_lea.vmem %s0, %s43
  %s45 = sadd.s32 0, 0
  %s46 = smul.u32 2, %s45
  %s47 = sadd.s32 0, 0
  %s48 = smul.u32 2, %s47
  %p49 = scmp.lt.s32.totalorder %s48, 1
  %s50 = scalar_select %p49, %s48, 1
  %s51 = smul.addr %s50, 8
  %s52 = scalar_lea.vmem %s1, %s51
  %s53 = sadd.s32 0, 0
  %s54 = smul.u32 2, %s53
  %p55 = scmp.eq.s32.totalorder 0, 0
  // Predicated region
  $region10: #{combo_loss.1} parent=0 // pred_check
    %p56 = pneg %p55
  $region11: #{combo_loss.1} parent=0 // pred_check_branch
    %58 = sbr.rel (%p56) target = $region13
  $region12: #{combo_loss.1} parent=0 // pred_region
    %59 = vst [vmem:[%s2] sm:$0xff] 0.0
    %60 = vst [vmem:[%s2 + $0x8] sm:$0xff] 0.0
    %61 = vst [vmem:[%s2 + $0x10] sm:$0xff] 0.0
  $region13: #{combo_loss.1} parent=0 // pred_fallthru
    _
  %v62 = vld [vmem:[%s44] sm:$0xff]
  %v63 = vld [vmem:[%s44 + $0x8] sm:$0xff]
  %v64 = vld [vmem:[%s52] sm:$0xff]
  %v65 = vld [vmem:[%s52 + $0x8] sm:$0xff]
  %v66 = vand.u32 2147483647, %v62
  %v67 = vand.u32 2147483647, %v63
  %v68 = vsub.f32 0.0, %v66
  %v69 = vsub.f32 0.0, %v67
  %v70 = vmul.f32 %v68, 1.442695
  %v71 = vpow.pop %v70
  %v72 = vmul.f32 %v69, 1.442695
  %v73 = vpow.pop %v72
  %v74 = vadd.f32 %v71, 1.0
  %v75 = vadd.f32 %v73, 1.0
  %v76 = vlog2.pop %v74
  %v77 = vmul.f32 %v76, 0.6931472
  %v78 = vlog2.pop %v75
  %v79 = vmul.f32 %v78, 0.6931472
  %v80 = vrcp.pop %v74
  %v81 = vmul.f32 %v74, %v80
  %v82 = vsub.f32 1.0, %v81
  %v83 = vmul.f32 %v80, %v82
  %v84 = vadd.f32 %v80, %v83
  %vm85 = vweird.f32 %v74
  %vm86 = vweird.f32 %v80
  %vm87 = vmor %vm85, %vm86
  %v88 = vsel %vm87, %v80, %v84
  %v89 = vand.u32 2147483647, %v74
  %vm90 = vcmp.eq.f32.partialorder %v89, 8.507059e+37
  %v91 = vand.u32 %v74, 2147483648
  %v92 = vor.u32 1.1754944e-38, %v91
  %v93 = vsel %vm90, %v92, %v88
  %v94 = vmul.f32 1.0, %v93
  %v95 = vrcp.pop %v75
  %v96 = vmul.f32 %v75, %v95
  %v97 = vsub.f32 1.0, %v96
  %v98 = vmul.f32 %v95, %v97
  %v99 = vadd.f32 %v95, %v98
  %vm100 = vweird.f32 %v75
  %vm101 = vweird.f32 %v95
  %vm102 = vmor %vm100, %vm101
  %v103 = vsel %vm102, %v95, %v99
  %v104 = vand.u32 2147483647, %v75
  %vm105 = vcmp.eq.f32.partialorder %v104, 8.507059e+37
  %v106 = vand.u32 %v75, 2147483648
  %v107 = vor.u32 1.1754944e-38, %v106
  %v108 = vsel %vm105, %v107, %v103
  %v109 = vmul.f32 1.0, %v108
  %vm110 = vcmp.ge.f32.partialorder %v62, 0.0
  %vm111 = vcmp.ge.f32.partialorder %v63, 0.0
  %v112 = vsub.f32 1.0, %v94
  %v113 = vsub.f32 1.0, %v109
  %v114 = vsel %vm110, %v94, %v112
  %v115 = vsel %vm111, %v109, %v113
  %v116 = vmin.f32 %v62, 0.0
  %v117 = vmin.f32 %v63, 0.0
  %v118 = vsub.f32 %v116, %v77
  %v119 = vsub.f32 %v117, %v79
  %v120 = vmax.f32 %v118, -20.723267
  %v121 = vmax.f32 %v119, -20.723267
  %v122 = vmin.f32 %v120, -1e-09
  %v123 = vmin.f32 %v121, -1e-09
  %v124 = vmax.f32 %v62, 0.0
  %v125 = vmax.f32 %v63, 0.0
  %v126 = vsub.f32 0.0, %v124
  %v127 = vsub.f32 0.0, %v125
  %v128 = vsub.f32 %v126, %v77
  %v129 = vsub.f32 %v127, %v79
  %v130 = vmax.f32 %v128, -20.723267
  %v131 = vmax.f32 %v129, -20.723267
  %v132 = vmin.f32 %v130, -1e-09
  %v133 = vmin.f32 %v131, -1e-09
  %v134 = vmul.f32 %v64, %v122
  %v135 = vmul.f32 %v65, %v123
  %v136 = vsub.f32 1.0, %v64
  %v137 = vsub.f32 1.0, %v65
  %v138 = vmul.f32 %v136, 0.5
  %v139 = vmul.f32 %v137, 0.5
  %v140 = vmul.f32 %v138, %v132
  %v141 = vmul.f32 %v139, %v133
  %v142 = vadd.f32 %v134, %v140
  %v143 = vadd.f32 %v135, %v141
  %v144 = vmul.f32 %v114, %v64
  %v145 = vmul.f32 %v115, %v65
  %v146 = vadd.f32 %v114, %v64
  %v147 = vadd.f32 %v115, %v65
  %v148 = vld [vmem:[%s2] sm:$0xff]
  %v149 = vadd.f32 %v144, %v145
  %v150 = vadd.f32 %v148, %v149
  %151 = vst [vmem:[%s2] sm:$0xff] %v150
  %v152 = vld [vmem:[%s2 + $0x8] sm:$0xff]
  %v153 = vadd.f32 %v146, %v147
  %v154 = vadd.f32 %v152, %v153
  %155 = vst [vmem:[%s2 + $0x8] sm:$0xff] %v154
  %v156 = vld [vmem:[%s2 + $0x10] sm:$0xff]
  %v157 = vadd.f32 %v142, %v143
  %v158 = vadd.f32 %v156, %v157
  %159 = vst [vmem:[%s2 + $0x10] sm:$0xff] %v158
  // Predicated region
  $region14: #{combo_loss.1} parent=0 // pred_check
    _
  $region15: #{combo_loss.1} parent=0 // pred_check_branch
    %161 = sbr.rel (0) target = $region17
  $region16: #{combo_loss.1} parent=0 // pred_region
    _
  $region17: #{combo_loss.1} parent=0 // pred_fallthru
    _
  // Predicated region
  $region18: #{combo_loss.1} parent=0 // pred_check
    _
  $region19: #{combo_loss.1} parent=0 // pred_check_branch
    %163 = sbr.rel (0) target = $region21
  $region20: #{combo_loss.1} parent=0 // pred_region
    _
  $region21: #{combo_loss.1} parent=0 // pred_fallthru
    _

</llo_original>
